<compile_context>
chip_gen: v7x
topology: tpu7x:2x2x1
jax: 0.10.0
libtpu: 0.0.40
codegen_flags: <defaults>
</compile_context>

<pallas_src>
import functools

import numpy as np
import jax
import jax.numpy as jnp
from jax.experimental import pallas as pl
from jax.experimental.pallas import tpu as pltpu


def _round_up(x, m):
    return ((x + m - 1) // m) * m


def _centroid_loss_kernel(gid_ref, xt_ref, same_sub_ref, out_ref,
                          sums_ref, musw_ref, pull_ref,
                          *, g, lmax, delta_v, delta_d, normalize, mxu_dtype):
    f32 = jnp.float32
    phase = pl.program_id(1)
    tile = pl.program_id(2)
    nt = pl.num_programs(2)

    dd = xt_ref.shape[0]          # embedding dim D
    tn = xt_ref.shape[1]          # points per tile
    mm_dtype = xt_ref.dtype if mxu_dtype is None else mxu_dtype

    # ---------------- shared per-tile prep (both phases) ----------------
    x = xt_ref[...].astype(f32)                                   # (D, TN)
    if normalize:
        nrm = jnp.sqrt(jnp.sum(x * x, axis=0, keepdims=True))     # (1, TN)
        x = x / (nrm + 1e-8)
    gid = gid_ref[0]                                              # (1, TN) int32
    g_iota = jax.lax.broadcasted_iota(jnp.int32, (g, tn), 0)      # (G, TN)
    onehot = jnp.where(g_iota == gid, 1.0, 0.0).astype(mm_dtype)  # (G, TN) lane-dense

    # ---------------- class start: reset persistent accumulators ----------------
    @pl.when(jnp.logical_and(phase == 0, tile == 0))
    def _():
        sums_ref[...] = jnp.zeros_like(sums_ref)
        pull_ref[...] = jnp.zeros_like(pull_ref)

    # ------------- phase 0: per-group [sum(x) | count]  -> (D+1, G) scratch -------------
    @pl.when(phase == 0)
    def _():
        x_ext = jnp.concatenate([x, jnp.ones((1, tn), f32)],
                                axis=0).astype(mm_dtype)          # (D+1, TN)
        # one fused matmul gives both centroid sums and member counts
        sums_ref[...] += jax.lax.dot_general(
            x_ext, onehot, (((1,), (1,)), ((), ())),
            preferred_element_type=f32)                           # (D+1, G)

    # ------------- phase 1: pull term per tile, push term / finalize at the end ---------
    @pl.when(phase == 1)
    def _():
        @pl.when(tile == 0)
        def _():
            counts_row = sums_ref[dd:dd + 1, :]                               # (1, G)
            mus_t = sums_ref[0:dd, :] / jnp.maximum(counts_row, 1.0)          # (D, G)
            present_row = jnp.where(counts_row > 0.5, 1.0, 0.0)               # (1, G)
            sums_t = jnp.transpose(sums_ref[...])                             # (G, D+1)
            present_col = jnp.where(sums_t[:, dd:dd + 1] > 0.5, 1.0, 0.0)     # (G, 1)
            # per-group M (#labels present in its subbatch): masked sublane reduction
            m_row = jnp.sum(same_sub_ref[...] * present_col, axis=0,
                            keepdims=True)                                    # (1, G)
            w_row = present_row / (jnp.maximum(m_row, 1.0) *
                                   jnp.maximum(counts_row, 1.0))              # (1, G)
            musw_ref[...] = jnp.concatenate([mus_t, w_row], axis=0)           # (D+1, G)

        # fused gather: [mu | w] per point with one matmul, lane-dense output
        gathered = jnp.dot(musw_ref[...].astype(mm_dtype), onehot,
                           preferred_element_type=f32)                        # (D+1, TN)
        mu_pt = gathered[0:dd, :]                                             # (D, TN)
        w_pt = gathered[dd:dd + 1, :]                                         # (1, TN)
        dist = jnp.sum(jnp.abs(mu_pt - x), axis=0, keepdims=True)             # (1, TN)
        pull_ref[...] += jnp.maximum(dist - delta_v, 0.0) ** 2 * w_pt

        @pl.when(tile == nt - 1)
        def _():
            same_sub = same_sub_ref[...]                                      # (G, G)
            counts_row = sums_ref[dd:dd + 1, :]                               # (1, G)
            present_row = jnp.where(counts_row > 0.5, 1.0, 0.0)               # (1, G)
            m_col = jnp.sum(same_sub * present_row, axis=1, keepdims=True)    # (G, 1)

            musw_t = jnp.transpose(musw_ref[...])                             # (G, D+1)
            mus = musw_t[:, 0:dd]                                             # (G, D)
            mus_t = musw_ref[0:dd, :]                                         # (D, G)
            present_col = jnp.where(musw_t[:, dd:dd + 1] > 0.0, 1.0, 0.0)     # (G, 1)

            # pairwise L1 between centroids: independent partial accumulators
            n_acc = max(1, min(4, dd))
            pds = [jnp.zeros((g, g), f32) for _ in range(n_acc)]
            for k in range(dd):
                pds[k % n_acc] = pds[k % n_acc] + jnp.abs(
                    mus[:, k:k + 1] - mus_t[k:k + 1, :])
            pd = pds[0]
            for extra in pds[1:]:
                pd = pd + extra                                               # (G, G)

            gi = jax.lax.broadcasted_iota(jnp.int32, (g, g), 0)
            gj = jax.lax.broadcasted_iota(jnp.int32, (g, g), 1)
            not_diag = jnp.where(gi == gj, 0.0, 1.0)                          # (G, G)
            gate = jnp.where(m_col > 1.5, 1.0, 0.0)                           # (G, 1)
            denom = jnp.maximum(m_col * (m_col - 1.0), 1.0)                   # (G, 1)
            push_w = same_sub * not_diag * (present_col * present_row) * gate / denom
            l_push = jnp.sum(jnp.maximum(2.0 * delta_d - pd, 0.0) ** 2 * push_w,
                             keepdims=True)                                   # (1, 1)

            l_pull = jnp.sum(pull_ref[...], keepdims=True)                    # (1, 1)
            b_cnt = jnp.sum(jnp.where(m_col > 0.5, 1.0, 0.0),
                            keepdims=True) / float(lmax)                      # (1, 1)
            out_ref[0] = (l_pull + l_push) / jnp.maximum(b_cnt, 1.0)


def _run_centroid_kernel(x_t, gid, same_sub, *, g, lmax, delta_v, delta_d,
                         normalize, tile_n, mxu_dtype=None):
    """x_t: (D, Npad) activations (lane-dense); gid: (C, 1, Npad) int32 group ids
    (== g for points belonging to no group); same_sub: (G, G) f32 block-diagonal
    same-subbatch mask.  Returns the loss summed over the C class slots."""
    c = gid.shape[0]
    emb_d, n_pad = x_t.shape
    nt = n_pad // tile_n
    kern = functools.partial(_centroid_loss_kernel, g=g, lmax=lmax,
                             delta_v=float(delta_v), delta_d=float(delta_d),
                             normalize=bool(normalize), mxu_dtype=mxu_dtype)
    out = pl.pallas_call(
        kern,
        out_shape=jax.ShapeDtypeStruct((c, 1, 1), jnp.float32),
        grid_spec=pltpu.PrefetchScalarGridSpec(
            num_scalar_prefetch=0,
            grid=(c, 2, nt),                                     # class / phase / N tiles
            in_specs=[
                pl.BlockSpec((1, 1, tile_n), lambda ci, p, t: (ci, 0, t)),   # gid
                pl.BlockSpec((emb_d, tile_n), lambda ci, p, t: (0, t)),      # x^T
                pl.BlockSpec((g, g), lambda ci, p, t: (0, 0)),               # same_sub
            ],
            out_specs=pl.BlockSpec((1, 1, 1), lambda ci, p, t: (ci, 0, 0)),
            scratch_shapes=[
                pltpu.VMEM((emb_d + 1, g), jnp.float32),   # [sum(x) | count] per group
                pltpu.VMEM((emb_d + 1, g), jnp.float32),   # [mu | w] per group
                pltpu.VMEM((1, tile_n), jnp.float32),      # pull-term partial sums
            ]),
        compiler_params=pltpu.CompilerParams(
            dimension_semantics=("parallel", "arbitrary", "arbitrary")),
    )(gid, x_t, same_sub)
    return jnp.sum(out)


class CentroidInstanceLoss:
    """JAX/Pallas port of the PyTorch CentroidInstanceLoss forward pass.

    Static capacities: instance labels must lie in [0, num_instance_labels) and
    subbatch indices in [0, num_subbatches).
    """

    def __init__(self, delta_v=0.5, delta_d=1.5, normalize=True, method=None,
                 ignore_labels=None, *, num_subbatches, num_instance_labels,
                 num_semantic_classes=None, tile_n=512, mxu_dtype=None):
        if method not in ['all', 'ignore', 'separate']:
            raise ValueError('invalid method!')
        if method in ['ignore', 'separate']:
            assert ignore_labels is not None
        if method == 'separate':
            assert num_semantic_classes is not None
        self.delta_v = delta_v
        self.delta_d = delta_d
        self.normalize = normalize
        self.method = method
        self.ignore_list = [int(v) for v in (ignore_labels or [])]
        self.ignore_labels = jnp.asarray(self.ignore_list, jnp.int32).reshape(-1)
        self.bmax = int(num_subbatches)
        self.lmax = int(num_instance_labels)
        self.g = self.bmax * self.lmax
        self.num_semantic_classes = num_semantic_classes
        self.mxu_dtype = mxu_dtype
        # keep the point tile a multiple of the 128-lane vreg width
        self.tile_n = max(128, _round_up(int(tile_n), 128))
        sub_of = np.arange(self.g) // self.lmax                  # host-side, no kernel idiv
        self._same_sub = jnp.asarray(
            (sub_of[:, None] == sub_of[None, :]).astype(np.float32))

    def __call__(self, outputs, labels, subbatch_indices, weights=None,
                 semantic_labels=None):
        n, _ = outputs.shape
        if outputs.dtype != jnp.bfloat16:
            outputs = outputs.astype(jnp.float32)   # bf16 stays bf16 -> bf16 MXU path
        lab = labels.astype(jnp.int32)
        sub = subbatch_indices.astype(jnp.int32)
        # TODO(synk): labels/subbatches outside the static capacity are dropped here;
        # torch.unique would instead treat them as additional real instances.
        in_range = ((lab >= 0) & (lab < self.lmax) &
                    (sub >= 0) & (sub < self.bmax))
        base_gid = sub * self.lmax + lab

        if self.method == 'all':
            valids = [jnp.ones((n,), jnp.bool_)]
        elif self.method == 'ignore':
            valids = [jnp.logical_not(jnp.any(
                semantic_labels[:, None] == self.ignore_labels[None, :], axis=-1))]
        else:  # 'separate': one class slot per non-ignored semantic class
            # TODO(synk): torch iterates torch.unique(semantic_labels); we iterate the
            # static class range — absent classes contribute exactly 0, so results match.
            valids = [(semantic_labels == s)
                      for s in range(self.num_semantic_classes)
                      if s not in self.ignore_list]
            if not valids:
                return jnp.float32(0.0)

        gid = jnp.stack(
            [jnp.where(v & in_range, base_gid, self.g) for v in valids], axis=0)
        c = gid.shape[0]
        n_pad = _round_up(max(n, 1), self.tile_n)
        gid = jnp.pad(gid, ((0, 0), (0, n_pad - n)),
                      constant_values=self.g).reshape(c, 1, n_pad).astype(jnp.int32)
        x_t = jnp.pad(outputs.T, ((0, 0), (0, n_pad - n)))       # (D, Npad) lane-dense

        return _run_centroid_kernel(
            x_t, gid, self._same_sub, g=self.g, lmax=self.lmax,
            delta_v=self.delta_v, delta_d=self.delta_d, normalize=self.normalize,
            tile_n=self.tile_n, mxu_dtype=self.mxu_dtype)


# ---------------------- pure-numpy reference (mirrors the torch code) ----------------------
def _np_centroid_loss(outputs, labels, sub, normalize, delta_d, delta_v):
    x = outputs.astype(np.float64)
    if normalize:
        x = x / (np.linalg.norm(x, axis=1) + 1e-8)[..., None]
    ub = np.unique(sub)
    B = len(ub)
    loss = 0.0
    for b in ub:
        m = sub == b
        xo, xl = x[m], labels[m]
        ul = np.unique(xl)
        M = len(ul)
        mus = np.zeros((M, xo.shape[1]))
        L_pull = 0.0
        for mi, lv in enumerate(ul):
            mk = xl == lv
            Nm = mk.sum()
            mu = xo[mk].mean(axis=0)
            mus[mi] = mu
            L_pull += (np.maximum(np.abs(mu - xo[mk]).sum(axis=1) - delta_v, 0.0) ** 2
                       ).sum() / (M * Nm)
        if M > 1:
            pd = np.abs(mus[:, None, :] - mus[None, :, :]).sum(-1)
            t = np.maximum(2 * delta_d - pd, 0.0)
            np.fill_diagonal(t, 0.0)
            L_push = (t ** 2).sum() / (M * (M - 1))
            loss += (L_pull + L_push) / B
        else:
            loss += L_pull / B
    return loss


def _np_forward(method, outputs, labels, sub, semantic, ignore, delta_v, delta_d, normalize):
    if method == 'all':
        return _np_centroid_loss(outputs, labels, sub, normalize, delta_d, delta_v)
    if method == 'ignore':
        valid = ~np.isin(semantic, ignore)
        return _np_centroid_loss(outputs[valid], labels[valid], sub[valid],
                                 normalize, delta_d, delta_v)
    loss = 0.0
    for s in np.unique(semantic):
        if s in ignore:
            continue
        m = semantic == s
        loss += _np_centroid_loss(outputs[m], labels[m], sub[m],
                                  normalize, delta_d, delta_v)
    return loss


if __name__ == "__main__":
    key = jax.random.PRNGKey(0)
    N, D = 200, 8            # points (exercises padding), embedding dim
    BMAX, LMAX = 2, 4        # subbatch / instance-label capacity  (G = 8)
    NUM_SEM = 3
    IGNORE = [0]

    k1, k2, k3, k4 = jax.random.split(key, 4)
    outputs = jax.random.normal(k1, (N, D), jnp.float32)
    labels = jax.random.randint(k2, (N,), 0, LMAX, jnp.int32)
    subbatch = jax.random.randint(k3, (N,), 0, BMAX, jnp.int32)
    semantic = jax.random.randint(k4, (N,), 0, NUM_SEM, jnp.int32)
    out_np, lab_np, sub_np, sem_np = map(np.asarray, (outputs, labels, subbatch, semantic))

    # method='ignore' (C=1 class slot, grid (1, 2, 2)) -------------------------------
    crit = CentroidInstanceLoss(delta_v=0.5, delta_d=1.5, normalize=True,
                                method='ignore', ignore_labels=IGNORE,
                                num_subbatches=BMAX, num_instance_labels=LMAX,
                                num_semantic_classes=NUM_SEM, tile_n=128)
    loss = jax.block_until_ready(crit(outputs, labels, subbatch, semantic_labels=semantic))
    ref = _np_forward('ignore', out_np, lab_np, sub_np, sem_np,
                      np.array(IGNORE), 0.5, 1.5, True)
    assert abs(float(loss) - ref) < 1e-3 * max(1.0, abs(ref)), (float(loss), ref)

    # method='separate' (classes folded into the kernel's parallel grid axis, C=2) ---
    crit_sep = CentroidInstanceLoss(delta_v=0.5, delta_d=1.5, normalize=True,
                                    method='separate', ignore_labels=IGNORE,
                                    num_subbatches=BMAX, num_instance_labels=LMAX,
                                    num_semantic_classes=NUM_SEM, tile_n=128)
    loss_sep = jax.block_until_ready(
        crit_sep(outputs, labels, subbatch, semantic_labels=semantic))
    ref_sep = _np_forward('separate', out_np, lab_np, sub_np, sem_np,
                          np.array(IGNORE), 0.5, 1.5, True)
    assert abs(float(loss_sep) - ref_sep) < 1e-3 * max(1.0, abs(ref_sep)), \
        (float(loss_sep), ref_sep)

    # bf16 activations feed the MXU directly in bf16 (looser tolerance) --------------
    loss_bf16 = jax.block_until_ready(
        crit(outputs.astype(jnp.bfloat16), labels, subbatch, semantic_labels=semantic))
    assert abs(float(loss_bf16) - ref) < 5e-2 * max(1.0, abs(ref)), (float(loss_bf16), ref)

    print("KERNEL_OK")
</pallas_src>

<mosaic_0001>
module attributes {stable_mosaic.version = 11 : i64} {
  func.func @_centroid_loss_kernel(%arg0: i32, %arg1: i32, %arg2: i32, %arg3: memref<1x1x128xi32, #tpu.memory_space<vmem>>, %arg4: memref<8x128xf32, #tpu.memory_space<vmem>>, %arg5: memref<8x8xf32, #tpu.memory_space<vmem>>, %arg6: memref<1x1x1xf32, #tpu.memory_space<vmem>>, %arg7: memref<9x8xf32, #tpu.memory_space<vmem>>, %arg8: memref<9x8xf32, #tpu.memory_space<vmem>>, %arg9: memref<1x128xf32, #tpu.memory_space<vmem>>) attributes {dimension_semantics = [#tpu.dimension_semantics<parallel>, #tpu.dimension_semantics<arbitrary>, #tpu.dimension_semantics<arbitrary>], iteration_bounds = array<i64: 1, 2, 2>, scalar_prefetch = 0 : i64, scratch_operands = 3 : i64, tpu.core_type = #tpu.core_type<tc>, window_params = [{transform_indices = @transform_0, window_bounds = array<i64: 1, 1, 128>}, {transform_indices = @transform_1, window_bounds = array<i64: 8, 128>}, {pipeline_mode = #tpu.pipeline_mode<synchronous>, transform_indices = @transform_2, window_bounds = array<i64: 8, 8>}, {transform_indices = @transform_3, window_bounds = array<i64: 1, 1, 1>}]} {
    %c0 = arith.constant 0 : index
    %c0_0 = arith.constant 0 : index
    %0 = vector.load %arg4[%c0, %c0_0] : memref<8x128xf32, #tpu.memory_space<vmem>>, vector<8x128xf32>
    %1 = arith.mulf %0, %0 : vector<8x128xf32>
    %cst = arith.constant dense<0.000000e+00> : vector<128xf32>
    %2 = vector.multi_reduction <add>, %1, %cst [0] : vector<8x128xf32> to vector<128xf32>
    %3 = vector.shape_cast %2 : vector<128xf32> to vector<1x128xf32>
    %4 = math.sqrt %3 : vector<1x128xf32>
    %cst_1 = arith.constant 9.99999993E-9 : f32
    %5 = vector.broadcast %cst_1 : f32 to vector<1x128xf32>
    %6 = arith.addf %4, %5 : vector<1x128xf32>
    %7 = vector.broadcast %6 : vector<1x128xf32> to vector<8x128xf32>
    %8 = arith.divf %0, %7 : vector<8x128xf32>
    %c0_2 = arith.constant 0 : index
    %c0_3 = arith.constant 0 : index
    %c0_4 = arith.constant 0 : index
    %9 = vector.load %arg3[%c0_2, %c0_3, %c0_4] : memref<1x1x128xi32, #tpu.memory_space<vmem>>, vector<1x1x128xi32>
    %10 = vector.shape_cast %9 : vector<1x1x128xi32> to vector<1x128xi32>
    %11 = tpu.iota {dimensions = array<i32: 0>} : vector<8x128xi32>
    %12 = vector.broadcast %10 : vector<1x128xi32> to vector<8x128xi32>
    %13 = arith.cmpi eq, %11, %12 : vector<8x128xi32>
    %cst_5 = arith.constant 1.000000e+00 : f32
    %cst_6 = arith.constant 0.000000e+00 : f32
    %14 = vector.broadcast %cst_5 : f32 to vector<8x128xf32>
    %15 = vector.broadcast %cst_6 : f32 to vector<8x128xf32>
    %16 = arith.select %13, %14, %15 : vector<8x128xi1>, vector<8x128xf32>
    %c0_i32 = arith.constant 0 : i32
    %17 = arith.cmpi eq, %arg1, %c0_i32 : i32
    %c0_i32_7 = arith.constant 0 : i32
    %18 = arith.cmpi eq, %arg2, %c0_i32_7 : i32
    %19 = arith.andi %17, %18 : i1
    %20 = arith.extui %19 : i1 to i32
    %c0_i32_8 = arith.constant 0 : i32
    %21 = arith.cmpi ne, %20, %c0_i32_8 : i32
    scf.if %21 {
      %cst_12 = arith.constant 0.000000e+00 : f32
      %28 = vector.broadcast %cst_12 : f32 to vector<9x8xf32>
      %c0_13 = arith.constant 0 : index
      %c0_14 = arith.constant 0 : index
      %29 = vector.load %arg7[%c0_13, %c0_14] : memref<9x8xf32, #tpu.memory_space<vmem>>, vector<9x8xf32>
      tpu.vector_store %arg7[%c0_13, %c0_14], %28 {strides = array<i32>} : memref<9x8xf32, #tpu.memory_space<vmem>>, vector<9x8xf32>,
      %cst_15 = arith.constant 0.000000e+00 : f32
      %30 = vector.broadcast %cst_15 : f32 to vector<1x128xf32>
      %c0_16 = arith.constant 0 : index
      %c0_17 = arith.constant 0 : index
      %31 = vector.load %arg9[%c0_16, %c0_17] : memref<1x128xf32, #tpu.memory_space<vmem>>, vector<1x128xf32>
      tpu.vector_store %arg9[%c0_16, %c0_17], %30 {strides = array<i32>} : memref<1x128xf32, #tpu.memory_space<vmem>>, vector<1x128xf32>,
    } else {
    }
    %c0_i32_9 = arith.constant 0 : i32
    %22 = arith.cmpi eq, %arg1, %c0_i32_9 : i32
    %23 = arith.extui %22 : i1 to i32
    %c0_i32_10 = arith.constant 0 : i32
    %24 = arith.cmpi ne, %23, %c0_i32_10 : i32
    scf.if %24 {
      %cst_12 = arith.constant 1.000000e+00 : f32
      %28 = vector.broadcast %cst_12 : f32 to vector<1x128xf32>
      %29 = tpu.concatenate %8, %28 in 0 : vector<8x128xf32>, vector<1x128xf32> -> vector<9x128xf32>
      %c0_13 = arith.constant 0 : index
      %c0_14 = arith.constant 0 : index
      %30 = vector.load %arg7[%c0_13, %c0_14] : memref<9x8xf32, #tpu.memory_space<vmem>>, vector<9x8xf32>
      %cst_15 = arith.constant dense<0.000000e+00> : vector<9x8xf32>
      %31 = tpu.matmul %29, %16, %cst_15 {dimension_numbers = #tpu.dot_dimension_numbers<[1], [1], [0], [0], [0, 0, 1, 0], [], []>} : vector<9x128xf32>, vector<8x128xf32>, vector<9x8xf32> -> vector<9x8xf32>
      %32 = arith.addf %30, %31 : vector<9x8xf32>
      %c0_16 = arith.constant 0 : index
      %c0_17 = arith.constant 0 : index
      %33 = vector.load %arg7[%c0_16, %c0_17] : memref<9x8xf32, #tpu.memory_space<vmem>>, vector<9x8xf32>
      tpu.vector_store %arg7[%c0_16, %c0_17], %32 {strides = array<i32>} : memref<9x8xf32, #tpu.memory_space<vmem>>, vector<9x8xf32>,
    } else {
    }
    %c1_i32 = arith.constant 1 : i32
    %25 = arith.cmpi eq, %arg1, %c1_i32 : i32
    %26 = arith.extui %25 : i1 to i32
    %c0_i32_11 = arith.constant 0 : i32
    %27 = arith.cmpi ne, %26, %c0_i32_11 : i32
    scf.if %27 {
      %c0_i32_12 = arith.constant 0 : i32
      %28 = arith.cmpi eq, %arg2, %c0_i32_12 : i32
      %29 = arith.extui %28 : i1 to i32
      %c0_i32_13 = arith.constant 0 : i32
      %30 = arith.cmpi ne, %29, %c0_i32_13 : i32
      scf.if %30 {
        %c8 = arith.constant 8 : index
        %c0_26 = arith.constant 0 : index
        %51 = vector.load %arg7[%c8, %c0_26] : memref<9x8xf32, #tpu.memory_space<vmem>>, vector<1x8xf32>
        %c0_27 = arith.constant 0 : index
        %c0_28 = arith.constant 0 : index
        %52 = vector.load %arg7[%c0_27, %c0_28] : memref<9x8xf32, #tpu.memory_space<vmem>>, vector<8x8xf32>
        %cst_29 = arith.constant 1.000000e+00 : f32
        %53 = vector.broadcast %cst_29 : f32 to vector<1x8xf32>
        %54 = arith.maximumf %51, %53 : vector<1x8xf32>
        %55 = vector.broadcast %54 : vector<1x8xf32> to vector<8x8xf32>
        %56 = arith.divf %52, %55 : vector<8x8xf32>
        %cst_30 = arith.constant 5.000000e-01 : f32
        %57 = vector.broadcast %cst_30 : f32 to vector<1x8xf32>
        %58 = arith.cmpf ogt, %51, %57 : vector<1x8xf32>
        %cst_31 = arith.constant 1.000000e+00 : f32
        %cst_32 = arith.constant 0.000000e+00 : f32
        %59 = vector.broadcast %cst_31 : f32 to vector<1x8xf32>
        %60 = vector.broadcast %cst_32 : f32 to vector<1x8xf32>
        %61 = arith.select %58, %59, %60 : vector<1x8xi1>, vector<1x8xf32>
        %c0_33 = arith.constant 0 : index
        %c0_34 = arith.constant 0 : index
        %62 = vector.load %arg7[%c0_33, %c0_34] : memref<9x8xf32, #tpu.memory_space<vmem>>, vector<9x8xf32>
        %63 = tpu.transpose %62, [1, 0] : vector<9x8xf32> -> vector<8x9xf32>
        %64 = vector.extract_strided_slice %63 {offsets = [0, 8], sizes = [8, 1], strides = [1, 1]} : vector<8x9xf32> to vector<8x1xf32>
        %cst_35 = arith.constant 5.000000e-01 : f32
        %65 = vector.broadcast %cst_35 : f32 to vector<8x1xf32>
        %66 = arith.cmpf ogt, %64, %65 : vector<8x1xf32>
        %cst_36 = arith.constant 1.000000e+00 : f32
        %cst_37 = arith.constant 0.000000e+00 : f32
        %67 = vector.broadcast %cst_36 : f32 to vector<8x1xf32>
        %68 = vector.broadcast %cst_37 : f32 to vector<8x1xf32>
        %69 = arith.select %66, %67, %68 : vector<8x1xi1>, vector<8x1xf32>
        %c0_38 = arith.constant 0 : index
        %c0_39 = arith.constant 0 : index
        %70 = vector.load %arg5[%c0_38, %c0_39] : memref<8x8xf32, #tpu.memory_space<vmem>>, vector<8x8xf32>
        %71 = vector.broadcast %69 : vector<8x1xf32> to vector<8x8xf32>
        %72 = arith.mulf %70, %71 : vector<8x8xf32>
        %cst_40 = arith.constant dense<0.000000e+00> : vector<8xf32>
        %73 = vector.multi_reduction <add>, %72, %cst_40 [0] : vector<8x8xf32> to vector<8xf32>
        %74 = vector.shape_cast %73 : vector<8xf32> to vector<1x8xf32>
        %cst_41 = arith.constant 1.000000e+00 : f32
        %75 = vector.broadcast %cst_41 : f32 to vector<1x8xf32>
        %76 = arith.maximumf %74, %75 : vector<1x8xf32>
        %cst_42 = arith.constant 1.000000e+00 : f32
        %77 = vector.broadcast %cst_42 : f32 to vector<1x8xf32>
        %78 = arith.maximumf %51, %77 : vector<1x8xf32>
        %79 = arith.mulf %76, %78 : vector<1x8xf32>
        %80 = arith.divf %61, %79 : vector<1x8xf32>
        %81 = tpu.concatenate %56, %80 in 0 : vector<8x8xf32>, vector<1x8xf32> -> vector<9x8xf32>
        %c0_43 = arith.constant 0 : index
        %c0_44 = arith.constant 0 : index
        %82 = vector.load %arg8[%c0_43, %c0_44] : memref<9x8xf32, #tpu.memory_space<vmem>>, vector<9x8xf32>
        tpu.vector_store %arg8[%c0_43, %c0_44], %81 {strides = array<i32>} : memref<9x8xf32, #tpu.memory_space<vmem>>, vector<9x8xf32>,
      } else {
      }
      %c0_14 = arith.constant 0 : index
      %c0_15 = arith.constant 0 : index
      %31 = vector.load %arg8[%c0_14, %c0_15] : memref<9x8xf32, #tpu.memory_space<vmem>>, vector<9x8xf32>
      %cst_16 = arith.constant dense<0.000000e+00> : vector<9x128xf32>
      %32 = tpu.matmul %31, %16, %cst_16 {dimension_numbers = #tpu.dot_dimension_numbers<[1], [0], [0], [1], [0, 0, 1, 1], [], []>} : vector<9x8xf32>, vector<8x128xf32>, vector<9x128xf32> -> vector<9x128xf32>
      %33 = vector.extract_strided_slice %32 {offsets = [0, 0], sizes = [8, 128], strides = [1, 1]} : vector<9x128xf32> to vector<8x128xf32>
      %34 = vector.extract_strided_slice %32 {offsets = [8, 0], sizes = [1, 128], strides = [1, 1]} : vector<9x128xf32> to vector<1x128xf32>
      %35 = arith.subf %33, %8 : vector<8x128xf32>
      %36 = math.absf %35 : vector<8x128xf32>
      %cst_17 = arith.constant dense<0.000000e+00> : vector<128xf32>
      %37 = vector.multi_reduction <add>, %36, %cst_17 [0] : vector<8x128xf32> to vector<128xf32>
      %38 = vector.shape_cast %37 : vector<128xf32> to vector<1x128xf32>
      %c0_18 = arith.constant 0 : index
      %c0_19 = arith.constant 0 : index
      %39 = vector.load %arg9[%c0_18, %c0_19] : memref<1x128xf32, #tpu.memory_space<vmem>>, vector<1x128xf32>
      %cst_20 = arith.constant 5.000000e-01 : f32
      %40 = vector.broadcast %cst_20 : f32 to vector<1x128xf32>
      %41 = arith.subf %38, %40 : vector<1x128xf32>
      %cst_21 = arith.constant 0.000000e+00 : f32
      %42 = vector.broadcast %cst_21 : f32 to vector<1x128xf32>
      %43 = arith.maximumf %41, %42 : vector<1x128xf32>
      %44 = arith.mulf %43, %43 : vector<1x128xf32>
      %45 = arith.mulf %44, %34 : vector<1x128xf32>
      %46 = arith.addf %39, %45 : vector<1x128xf32>
      %c0_22 = arith.constant 0 : index
      %c0_23 = arith.constant 0 : index
      %47 = vector.load %arg9[%c0_22, %c0_23] : memref<1x128xf32, #tpu.memory_space<vmem>>, vector<1x128xf32>
      tpu.vector_store %arg9[%c0_22, %c0_23], %46 {strides = array<i32>} : memref<1x128xf32, #tpu.memory_space<vmem>>, vector<1x128xf32>,
      %c1_i32_24 = arith.constant 1 : i32
      %48 = arith.cmpi eq, %arg2, %c1_i32_24 : i32
      %49 = arith.extui %48 : i1 to i32
      %c0_i32_25 = arith.constant 0 : i32
      %50 = arith.cmpi ne, %49, %c0_i32_25 : i32
      scf.if %50 {
        %c0_26 = arith.constant 0 : index
        %c0_27 = arith.constant 0 : index
        %51 = vector.load %arg5[%c0_26, %c0_27] : memref<8x8xf32, #tpu.memory_space<vmem>>, vector<8x8xf32>
        %c8 = arith.constant 8 : index
        %c0_28 = arith.constant 0 : index
        %52 = vector.load %arg7[%c8, %c0_28] : memref<9x8xf32, #tpu.memory_space<vmem>>, vector<1x8xf32>
        %cst_29 = arith.constant 5.000000e-01 : f32
        %53 = vector.broadcast %cst_29 : f32 to vector<1x8xf32>
        %54 = arith.cmpf ogt, %52, %53 : vector<1x8xf32>
        %cst_30 = arith.constant 1.000000e+00 : f32
        %cst_31 = arith.constant 0.000000e+00 : f32
        %55 = vector.broadcast %cst_30 : f32 to vector<1x8xf32>
        %56 = vector.broadcast %cst_31 : f32 to vector<1x8xf32>
        %57 = arith.select %54, %55, %56 : vector<1x8xi1>, vector<1x8xf32>
        %58 = vector.broadcast %57 : vector<1x8xf32> to vector<8x8xf32>
        %59 = arith.mulf %51, %58 : vector<8x8xf32>
        %cst_32 = arith.constant dense<0.000000e+00> : vector<8xf32>
        %60 = vector.multi_reduction <add>, %59, %cst_32 [1] : vector<8x8xf32> to vector<8xf32>
        %61 = vector.shape_cast %60 : vector<8xf32> to vector<8x1xf32>
        %c0_33 = arith.constant 0 : index
        %c0_34 = arith.constant 0 : index
        %62 = vector.load %arg8[%c0_33, %c0_34] : memref<9x8xf32, #tpu.memory_space<vmem>>, vector<9x8xf32>
        %63 = tpu.transpose %62, [1, 0] : vector<9x8xf32> -> vector<8x9xf32>
        %64 = vector.extract_strided_slice %63 {offsets = [0, 0], sizes = [8, 8], strides = [1, 1]} : vector<8x9xf32> to vector<8x8xf32>
        %c0_35 = arith.constant 0 : index
        %c0_36 = arith.constant 0 : index
        %65 = vector.load %arg8[%c0_35, %c0_36] : memref<9x8xf32, #tpu.memory_space<vmem>>, vector<8x8xf32>
        %66 = vector.extract_strided_slice %63 {offsets = [0, 8], sizes = [8, 1], strides = [1, 1]} : vector<8x9xf32> to vector<8x1xf32>
        %cst_37 = arith.constant 0.000000e+00 : f32
        %67 = vector.broadcast %cst_37 : f32 to vector<8x1xf32>
        %68 = arith.cmpf ogt, %66, %67 : vector<8x1xf32>
        %cst_38 = arith.constant 1.000000e+00 : f32
        %cst_39 = arith.constant 0.000000e+00 : f32
        %69 = vector.broadcast %cst_38 : f32 to vector<8x1xf32>
        %70 = vector.broadcast %cst_39 : f32 to vector<8x1xf32>
        %71 = arith.select %68, %69, %70 : vector<8x1xi1>, vector<8x1xf32>
        %cst_40 = arith.constant 0.000000e+00 : f32
        %72 = vector.broadcast %cst_40 : f32 to vector<8x8xf32>
        %cst_41 = arith.constant 0.000000e+00 : f32
        %73 = vector.broadcast %cst_41 : f32 to vector<8x8xf32>
        %cst_42 = arith.constant 0.000000e+00 : f32
        %74 = vector.broadcast %cst_42 : f32 to vector<8x8xf32>
        %cst_43 = arith.constant 0.000000e+00 : f32
        %75 = vector.broadcast %cst_43 : f32 to vector<8x8xf32>
        %76 = vector.extract_strided_slice %64 {offsets = [0, 0], sizes = [8, 1], strides = [1, 1]} : vector<8x8xf32> to vector<8x1xf32>
        %77 = vector.extract_strided_slice %65 {offsets = [0, 0], sizes = [1, 8], strides = [1, 1]} : vector<8x8xf32> to vector<1x8xf32>
        %78 = vector.broadcast %76 : vector<8x1xf32> to vector<8x8xf32>
        %79 = vector.broadcast %77 : vector<1x8xf32> to vector<8x8xf32>
        %80 = arith.subf %78, %79 : vector<8x8xf32>
        %81 = math.absf %80 : vector<8x8xf32>
        %82 = arith.addf %72, %81 : vector<8x8xf32>
        %83 = vector.extract_strided_slice %64 {offsets = [0, 1], sizes = [8, 1], strides = [1, 1]} : vector<8x8xf32> to vector<8x1xf32>
        %84 = vector.extract_strided_slice %65 {offsets = [1, 0], sizes = [1, 8], strides = [1, 1]} : vector<8x8xf32> to vector<1x8xf32>
        %85 = vector.broadcast %83 : vector<8x1xf32> to vector<8x8xf32>
        %86 = vector.broadcast %84 : vector<1x8xf32> to vector<8x8xf32>
        %87 = arith.subf %85, %86 : vector<8x8xf32>
        %88 = math.absf %87 : vector<8x8xf32>
        %89 = arith.addf %73, %88 : vector<8x8xf32>
        %90 = vector.extract_strided_slice %64 {offsets = [0, 2], sizes = [8, 1], strides = [1, 1]} : vector<8x8xf32> to vector<8x1xf32>
        %91 = vector.extract_strided_slice %65 {offsets = [2, 0], sizes = [1, 8], strides = [1, 1]} : vector<8x8xf32> to vector<1x8xf32>
        %92 = vector.broadcast %90 : vector<8x1xf32> to vector<8x8xf32>
        %93 = vector.broadcast %91 : vector<1x8xf32> to vector<8x8xf32>
        %94 = arith.subf %92, %93 : vector<8x8xf32>
        %95 = math.absf %94 : vector<8x8xf32>
        %96 = arith.addf %74, %95 : vector<8x8xf32>
        %97 = vector.extract_strided_slice %64 {offsets = [0, 3], sizes = [8, 1], strides = [1, 1]} : vector<8x8xf32> to vector<8x1xf32>
        %98 = vector.extract_strided_slice %65 {offsets = [3, 0], sizes = [1, 8], strides = [1, 1]} : vector<8x8xf32> to vector<1x8xf32>
        %99 = vector.broadcast %97 : vector<8x1xf32> to vector<8x8xf32>
        %100 = vector.broadcast %98 : vector<1x8xf32> to vector<8x8xf32>
        %101 = arith.subf %99, %100 : vector<8x8xf32>
        %102 = math.absf %101 : vector<8x8xf32>
        %103 = arith.addf %75, %102 : vector<8x8xf32>
        %104 = vector.extract_strided_slice %64 {offsets = [0, 4], sizes = [8, 1], strides = [1, 1]} : vector<8x8xf32> to vector<8x1xf32>
        %105 = vector.extract_strided_slice %65 {offsets = [4, 0], sizes = [1, 8], strides = [1, 1]} : vector<8x8xf32> to vector<1x8xf32>
        %106 = vector.broadcast %104 : vector<8x1xf32> to vector<8x8xf32>
        %107 = vector.broadcast %105 : vector<1x8xf32> to vector<8x8xf32>
        %108 = arith.subf %106, %107 : vector<8x8xf32>
        %109 = math.absf %108 : vector<8x8xf32>
        %110 = arith.addf %82, %109 : vector<8x8xf32>
        %111 = vector.extract_strided_slice %64 {offsets = [0, 5], sizes = [8, 1], strides = [1, 1]} : vector<8x8xf32> to vector<8x1xf32>
        %112 = vector.extract_strided_slice %65 {offsets = [5, 0], sizes = [1, 8], strides = [1, 1]} : vector<8x8xf32> to vector<1x8xf32>
        %113 = vector.broadcast %111 : vector<8x1xf32> to vector<8x8xf32>
        %114 = vector.broadcast %112 : vector<1x8xf32> to vector<8x8xf32>
        %115 = arith.subf %113, %114 : vector<8x8xf32>
        %116 = math.absf %115 : vector<8x8xf32>
        %117 = arith.addf %89, %116 : vector<8x8xf32>
        %118 = vector.extract_strided_slice %64 {offsets = [0, 6], sizes = [8, 1], strides = [1, 1]} : vector<8x8xf32> to vector<8x1xf32>
        %119 = vector.extract_strided_slice %65 {offsets = [6, 0], sizes = [1, 8], strides = [1, 1]} : vector<8x8xf32> to vector<1x8xf32>
        %120 = vector.broadcast %118 : vector<8x1xf32> to vector<8x8xf32>
        %121 = vector.broadcast %119 : vector<1x8xf32> to vector<8x8xf32>
        %122 = arith.subf %120, %121 : vector<8x8xf32>
        %123 = math.absf %122 : vector<8x8xf32>
        %124 = arith.addf %96, %123 : vector<8x8xf32>
        %125 = vector.extract_strided_slice %64 {offsets = [0, 7], sizes = [8, 1], strides = [1, 1]} : vector<8x8xf32> to vector<8x1xf32>
        %126 = vector.extract_strided_slice %65 {offsets = [7, 0], sizes = [1, 8], strides = [1, 1]} : vector<8x8xf32> to vector<1x8xf32>
        %127 = vector.broadcast %125 : vector<8x1xf32> to vector<8x8xf32>
        %128 = vector.broadcast %126 : vector<1x8xf32> to vector<8x8xf32>
        %129 = arith.subf %127, %128 : vector<8x8xf32>
        %130 = math.absf %129 : vector<8x8xf32>
        %131 = arith.addf %103, %130 : vector<8x8xf32>
        %132 = arith.addf %110, %117 : vector<8x8xf32>
        %133 = arith.addf %132, %124 : vector<8x8xf32>
        %134 = arith.addf %133, %131 : vector<8x8xf32>
        %135 = tpu.iota {dimensions = array<i32: 0>} : vector<8x8xi32>
        %136 = tpu.iota {dimensions = array<i32: 1>} : vector<8x8xi32>
        %137 = arith.cmpi eq, %135, %136 : vector<8x8xi32>
        %cst_44 = arith.constant 0.000000e+00 : f32
        %cst_45 = arith.constant 1.000000e+00 : f32
        %138 = vector.broadcast %cst_44 : f32 to vector<8x8xf32>
        %139 = vector.broadcast %cst_45 : f32 to vector<8x8xf32>
        %140 = arith.select %137, %138, %139 : vector<8x8xi1>, vector<8x8xf32>
        %cst_46 = arith.constant 1.500000e+00 : f32
        %141 = vector.broadcast %cst_46 : f32 to vector<8x1xf32>
        %142 = arith.cmpf ogt, %61, %141 : vector<8x1xf32>
        %cst_47 = arith.constant 1.000000e+00 : f32
        %cst_48 = arith.constant 0.000000e+00 : f32
        %143 = vector.broadcast %cst_47 : f32 to vector<8x1xf32>
        %144 = vector.broadcast %cst_48 : f32 to vector<8x1xf32>
        %145 = arith.select %142, %143, %144 : vector<8x1xi1>, vector<8x1xf32>
        %cst_49 = arith.constant 1.000000e+00 : f32
        %146 = vector.broadcast %cst_49 : f32 to vector<8x1xf32>
        %147 = arith.subf %61, %146 : vector<8x1xf32>
        %148 = arith.mulf %61, %147 : vector<8x1xf32>
        %cst_50 = arith.constant 1.000000e+00 : f32
        %149 = vector.broadcast %cst_50 : f32 to vector<8x1xf32>
        %150 = arith.maximumf %148, %149 : vector<8x1xf32>
        %151 = arith.mulf %51, %140 : vector<8x8xf32>
        %152 = vector.broadcast %71 : vector<8x1xf32> to vector<8x8xf32>
        %153 = vector.broadcast %57 : vector<1x8xf32> to vector<8x8xf32>
        %154 = arith.mulf %152, %153 : vector<8x8xf32>
        %155 = arith.mulf %151, %154 : vector<8x8xf32>
        %156 = vector.broadcast %145 : vector<8x1xf32> to vector<8x8xf32>
        %157 = arith.mulf %155, %156 : vector<8x8xf32>
        %158 = vector.broadcast %150 : vector<8x1xf32> to vector<8x8xf32>
        %159 = arith.divf %157, %158 : vector<8x8xf32>
        %cst_51 = arith.constant 3.000000e+00 : f32
        %160 = vector.broadcast %cst_51 : f32 to vector<8x8xf32>
        %161 = arith.subf %160, %134 : vector<8x8xf32>
        %cst_52 = arith.constant 0.000000e+00 : f32
        %162 = vector.broadcast %cst_52 : f32 to vector<8x8xf32>
        %163 = arith.maximumf %161, %162 : vector<8x8xf32>
        %164 = arith.mulf %163, %163 : vector<8x8xf32>
        %165 = arith.mulf %164, %159 : vector<8x8xf32>
        %166 = vector.shape_cast %165 : vector<8x8xf32> to vector<1x8x8xf32>
        %cst_53 = arith.constant dense<0.000000e+00> : vector<1xf32>
        %167 = vector.multi_reduction <add>, %166, %cst_53 [1, 2] : vector<1x8x8xf32> to vector<1xf32>
        %168 = vector.shape_cast %167 : vector<1xf32> to vector<1x1x1xf32>
        %169 = vector.extract %168[0, 0, 0] : f32 from vector<1x1x1xf32>
        %170 = vector.broadcast %169 : f32 to vector<1x1xf32>
        %c0_54 = arith.constant 0 : index
        %c0_55 = arith.constant 0 : index
        %171 = vector.load %arg9[%c0_54, %c0_55] : memref<1x128xf32, #tpu.memory_space<vmem>>, vector<1x128xf32>
        %172 = vector.shape_cast %171 : vector<1x128xf32> to vector<1x1x128xf32>
        %cst_56 = arith.constant dense<0.000000e+00> : vector<1xf32>
        %173 = vector.multi_reduction <add>, %172, %cst_56 [1, 2] : vector<1x1x128xf32> to vector<1xf32>
        %174 = vector.shape_cast %173 : vector<1xf32> to vector<1x1x1xf32>
        %175 = vector.extract %174[0, 0, 0] : f32 from vector<1x1x1xf32>
        %176 = vector.broadcast %175 : f32 to vector<1x1xf32>
        %cst_57 = arith.constant 5.000000e-01 : f32
        %177 = vector.broadcast %cst_57 : f32 to vector<8x1xf32>
        %178 = arith.cmpf ogt, %61, %177 : vector<8x1xf32>
        %cst_58 = arith.constant 1.000000e+00 : f32
        %cst_59 = arith.constant 0.000000e+00 : f32
        %179 = vector.broadcast %cst_58 : f32 to vector<8x1xf32>
        %180 = vector.broadcast %cst_59 : f32 to vector<8x1xf32>
        %181 = arith.select %178, %179, %180 : vector<8x1xi1>, vector<8x1xf32>
        %182 = vector.shape_cast %181 : vector<8x1xf32> to vector<1x8x1xf32>
        %cst_60 = arith.constant dense<0.000000e+00> : vector<1xf32>
        %183 = vector.multi_reduction <add>, %182, %cst_60 [1, 2] : vector<1x8x1xf32> to vector<1xf32>
        %184 = vector.shape_cast %183 : vector<1xf32> to vector<1x1x1xf32>
        %185 = vector.extract %184[0, 0, 0] : f32 from vector<1x1x1xf32>
        %186 = vector.broadcast %185 : f32 to vector<1x1xf32>
        %cst_61 = arith.constant 4.000000e+00 : f32
        %187 = vector.broadcast %cst_61 : f32 to vector<1x1xf32>
        %188 = arith.divf %186, %187 : vector<1x1xf32>
        %189 = arith.addf %176, %170 : vector<1x1xf32>
        %cst_62 = arith.constant 1.000000e+00 : f32
        %190 = vector.broadcast %cst_62 : f32 to vector<1x1xf32>
        %191 = arith.maximumf %188, %190 : vector<1x1xf32>
        %192 = arith.divf %189, %191 : vector<1x1xf32>
        %c0_63 = arith.constant 0 : index
        %c0_64 = arith.constant 0 : index
        %c0_65 = arith.constant 0 : index
        %193 = vector.load %arg6[%c0_63, %c0_64, %c0_65] : memref<1x1x1xf32, #tpu.memory_space<vmem>>, vector<1x1x1xf32>
        %194 = vector.shape_cast %193 : vector<1x1x1xf32> to vector<1x1xf32>
        %195 = vector.shape_cast %192 : vector<1x1xf32> to vector<1x1x1xf32>
        tpu.vector_store %arg6[%c0_63, %c0_64, %c0_65], %195 {strides = array<i32>} : memref<1x1x1xf32, #tpu.memory_space<vmem>>, vector<1x1x1xf32>,
      } else {
      }
    } else {
    }
    return
  }
  func.func @transform_0(%arg0: i32, %arg1: i32, %arg2: i32) -> (i32, i32, i32) {
    %c0_i32 = arith.constant 0 : i32
    %c0_i32_0 = arith.constant 0 : i32
    return %arg0, %c0_i32, %arg2 : i32, i32, i32
  }
  func.func @transform_1(%arg0: i32, %arg1: i32, %arg2: i32) -> (i32, i32) {
    %c0_i32 = arith.constant 0 : i32
    %c0_i32_0 = arith.constant 0 : i32
    return %c0_i32, %arg2 : i32, i32
  }
  func.func @transform_2(%arg0: i32, %arg1: i32, %arg2: i32) -> (i32, i32) {
    %c0_i32 = arith.constant 0 : i32
    %c0_i32_0 = arith.constant 0 : i32
    %c0_i32_1 = arith.constant 0 : i32
    return %c0_i32, %c0_i32_0 : i32, i32
  }
  func.func @transform_3(%arg0: i32, %arg1: i32, %arg2: i32) -> (i32, i32, i32) {
    %c0_i32 = arith.constant 0 : i32
    %c0_i32_0 = arith.constant 0 : i32
    %c0_i32_1 = arith.constant 0 : i32
    return %arg0, %c0_i32, %c0_i32_0 : i32, i32, i32
  }
}

</mosaic_0001>

<llo_original>
// kernel: tpu_custom_call.1
$region0: #{tpu_custom_call.1}
  #allocation0 [shape = 'u32[]', space=smem, size = 0x4, offset = 0x4, fixed_abs, tag = 'smem constant byte address 0x4 - core index']
  #allocation1 [shape = 'u32[144,128]{1,0:T(1,128)}', space=vmem, size = 0x12000, scoped, tag = 'internal scratch']
  #allocation2 [shape = 'f32[9,8]{1,0:T(8,128)}', space=vmem, size = 0x2000, scoped, tag = 'scratch operand']
  #allocation3 [shape = 'f32[9,8]{1,0:T(8,128)}', space=vmem, size = 0x2000, scoped, tag = 'scratch operand']
  #allocation4 [shape = 'f32[1,128]{1,0:T(1,128)}', space=vmem, size = 0x200, scoped, tag = 'scratch operand']
  %s0 = inlined_call_operand.hbm [shape: s32[1,1,256], index: 0, kind: input, shape index: {}]
  %s1 = inlined_call_operand.hbm [shape: f32[8,256], index: 1, kind: input, shape index: {}]
  %s2 = inlined_call_operand.hbm [shape: f32[8,8], index: 2, kind: input, shape index: {}]
  %s3 = inlined_call_operand.hbm [shape: f32[1,1,1], index: 3, kind: output, shape index: {}]
  %s4 = sld [smem:[#allocation0]]
  $region77: #{tpu_custom_call.1} parent=0
    _
  %s6 = ssub.s32 1, %s4
  %s7 = scalar_select 0, %s6, %s4
  $region1: #{tpu_custom_call.1} parent=0
    #allocation5 [shape = 'u8[1024]{0}', space=vmem, size = 0x400, scoped, tag = 'input window, operand 0']
    #allocation6 [shape = 's32[2]{0}', space=sflag, size = 0x8, scoped, tag = 'scoped memory for tpu_custom_call.1']
    #allocation7 [shape = 's32[2]{0}', space=sflag, size = 0x8, scoped, tag = 'scoped memory for tpu_custom_call.1']
    #allocation8 [shape = 'u8[8192]{0}', space=vmem, size = 0x2000, scoped, tag = 'input window, operand 1']
    #allocation9 [shape = 's32[2]{0}', space=sflag, size = 0x8, scoped, tag = 'scoped memory for tpu_custom_call.1']
    #allocation10 [shape = 'u8[4096]{0}', space=vmem, size = 0x1000, scoped, tag = 'input window, operand 2, single buffered']
    #allocation11 [shape = 'u8[512]{0}', space=vmem, size = 0x400, scoped, tag = 'output window, operand 0, single buffered']
    %8 = vsyncpa [#allocation6], 0
    %s9 = scalar_lea.sflag [#allocation6], 1
    %10 = vsyncpa %s9, 0
    %11 = vsyncpa [#allocation9], 0
    %s12 = scalar_lea.sflag [#allocation9], 1
    %13 = vsyncpa %s12, 0
    %14 = vsyncpa [#allocation7], 0
    loop: start=0, step=1, limit=6
    $region2: #{tpu_custom_call.1} parent=1 // loop_pre_header
      _
    $region3: #{tpu_custom_call.1} parent=1 // loop_header
      %s16 = sphi 0, %s20
      %p17 = scmp.ge.s32.totalorder %s16, 6
      %s23 = sphi 0, %s42
      %s24 = sphi 0, %s38
      %s25 = sphi 0, %s34
      %s26 = sphi 0, %s23
      %s27 = sphi 0, %s24
      %s28 = sphi 0, %s25
      %s29 = sphi 0, %s26
      %s30 = sphi 0, %s27
      %s31 = sphi 0, %s28
      %s47 = sphi 0, %s49
      %s50 = sphi 0, %s47
      %s51 = sphi 0, %s50
      %s67 = sphi 0, %s51
      %s73 = sphi 0, %s75
      %s76 = sphi 0, %s73
      %s77 = sphi 0, %s76
      %s93 = sphi 0, %s77
      %s97 = sphi 0, %s97
      %s99 = sphi 0, %s97
      %s100 = sphi 0, %s99
      %s114 = sphi 0, %s100
      %s120 = sphi 0, %s122
      %s123 = sphi 0, %s120
      %s124 = sphi 0, %s123
      %s140 = sphi 0, %s124
    $region4: #{tpu_custom_call.1} parent=1 // loop_header_branch
      %19 = sbr.rel (%p17) target = $region8
    $region5: #{tpu_custom_call.1} parent=1 // loop_body
      %s21 = ssub.s32 %s16, 1
      %s22 = ssub.s32 %s16, 2
      %s32 = sadd.s32 1, %s25
      %p33 = scmp.ge.s32.totalorder %s32, 2
      %s34 = scalar_select %p33, 0, %s32
      %s35 = sadd.s32 1, %s24
      %s36 = scalar_select %p33, %s35, %s24
      %p37 = scmp.ge.s32.totalorder %s36, 2
      %s38 = scalar_select %p37, 0, %s36
      %s39 = sadd.s32 1, %s23
      %s40 = scalar_select %p37, %s39, %s23
      %p41 = scmp.ge.s32.totalorder %s40, 1
      %s42 = scalar_select %p41, 0, %s40
      %s43 = ssub.s32 %s23, %s42
      %s44 = ssub.s32 %s25, %s34
      %s45 = sor.u32 %s43, %s44
      %p46 = scmp.eq.s32.totalorder %s45, 0
      %s48 = sadd.s32 %s47, 1
      %s49 = scalar_select %p46, %s47, %s48
      %p52 = pneg %p46
      %p53 = scmp.eq.s32.totalorder %s16, 3
      %p54 = por %p52, %p53
      %p55 = scmp.ne.s32.totalorder %s47, %s50
      %p56 = scmp.eq.s32.totalorder %s16, 0
      %p57 = por %p55, %p56
      %p58 = scmp.ne.s32.totalorder %s47, %s50
      %p59 = scmp.eq.s32.totalorder %s21, 3
      %p60 = por %p58, %p59
      %p61 = scmp.ne.s32.totalorder %s50, %s51
      %p62 = scmp.eq.s32.totalorder %s21, 0
      %p63 = por %p61, %p62
      %p64 = scmp.ne.s32.totalorder %s50, %s51
      %p65 = scmp.eq.s32.totalorder %s22, 3
      %p66 = por %p64, %p65
      %p68 = scmp.ne.s32.totalorder %s51, %s67
      %p69 = scmp.eq.s32.totalorder %s22, 0
      %p70 = por %p68, %p69
      %s71 = ssub.s32 %s25, %s34
      %p72 = scmp.eq.s32.totalorder %s71, 0
      %s74 = sadd.s32 %s73, 1
      %s75 = scalar_select %p72, %s73, %s74
      %p78 = pneg %p72
      %p79 = scmp.eq.s32.totalorder %s16, 3
      %p80 = por %p78, %p79
      %p81 = scmp.ne.s32.totalorder %s73, %s76
      %p82 = scmp.eq.s32.totalorder %s16, 0
      %p83 = por %p81, %p82
      %p84 = scmp.ne.s32.totalorder %s73, %s76
      %p85 = scmp.eq.s32.totalorder %s21, 3
      %p86 = por %p84, %p85
      %p87 = scmp.ne.s32.totalorder %s76, %s77
      %p88 = scmp.eq.s32.totalorder %s21, 0
      %p89 = por %p87, %p88
      %p90 = scmp.ne.s32.totalorder %s76, %s77
      %p91 = scmp.eq.s32.totalorder %s22, 3
      %p92 = por %p90, %p91
      %p94 = scmp.ne.s32.totalorder %s77, %s93
      %p95 = scmp.eq.s32.totalorder %s22, 0
      %p96 = por %p94, %p95
      %s98 = sadd.s32 %s97, 1
      %p101 = scmp.eq.s32.totalorder %s16, 3
      %p102 = scmp.ne.s32.totalorder %s97, %s99
      %p103 = scmp.eq.s32.totalorder %s16, 0
      %p104 = por %p102, %p103
      %p105 = scmp.ne.s32.totalorder %s97, %s99
      %p106 = scmp.eq.s32.totalorder %s21, 3
      %p107 = por %p105, %p106
      %p108 = scmp.ne.s32.totalorder %s99, %s100
      %p109 = scmp.eq.s32.totalorder %s21, 0
      %p110 = por %p108, %p109
      %p111 = scmp.ne.s32.totalorder %s99, %s100
      %p112 = scmp.eq.s32.totalorder %s22, 3
      %p113 = por %p111, %p112
      %p115 = scmp.ne.s32.totalorder %s100, %s114
      %p116 = scmp.eq.s32.totalorder %s22, 0
      %p117 = por %p115, %p116
      %s118 = ssub.s32 %s23, %s42
      %p119 = scmp.eq.s32.totalorder %s118, 0
      %s121 = sadd.s32 %s120, 1
      %s122 = scalar_select %p119, %s120, %s121
      %p125 = pneg %p119
      %p126 = scmp.eq.s32.totalorder %s16, 3
      %p127 = por %p125, %p126
      %p128 = scmp.ne.s32.totalorder %s120, %s123
      %p129 = scmp.eq.s32.totalorder %s16, 0
      %p130 = por %p128, %p129
      %p131 = scmp.ne.s32.totalorder %s120, %s123
      %p132 = scmp.eq.s32.totalorder %s21, 3
      %p133 = por %p131, %p132
      %p134 = scmp.ne.s32.totalorder %s123, %s124
      %p135 = scmp.eq.s32.totalorder %s21, 0
      %p136 = por %p134, %p135
      %p137 = scmp.ne.s32.totalorder %s123, %s124
      %p138 = scmp.eq.s32.totalorder %s22, 3
      %p139 = por %p137, %p138
      %p141 = scmp.ne.s32.totalorder %s124, %s140
      %p142 = scmp.eq.s32.totalorder %s22, 0
      %p143 = por %p141, %p142
      %p144 = scmp.le.s32.totalorder 1, %s16
      %p145 = scmp.lt.s32.totalorder %s16, 5
      %p146 = pnand %p144, %p145
      %p147 = pneg %p146
      // Predicated region
      $region9: #{tpu_custom_call.1} parent=5 // pred_check
        _
      $region10: #{tpu_custom_call.1} parent=5 // pred_check_branch
        %149 = sbr.rel (%p146) target = $region12
      $region11: #{tpu_custom_call.1} parent=5 // pred_region
        %s150 = ssub.s32 %s16, 1
        // Predicated region
        $region13: #{tpu_custom_call.1} parent=11 // pred_check
          %p151 = pneg %p110
        $region14: #{tpu_custom_call.1} parent=11 // pred_check_branch
          %153 = sbr.rel (%p151) target = $region16
        $region15: #{tpu_custom_call.1} parent=11 // pred_region
          %s155 = ssub.s32 128, 128
          %156 = vsyncadd [#allocation9], %s155
          %s158 = sshll.u32 [#allocation10], 4
          %s159 = int_to_ptr.vmem [resolvable:$true] %s158
          %161 = dma.hbm_to_vmem [thread:$0]  %s2, 128, %s159, [#allocation9]
        $region16: #{tpu_custom_call.1} parent=11 // pred_fallthru
          _
      $region12: #{tpu_custom_call.1} parent=5 // pred_fallthru
        _
      %p162 = scmp.lt.s32.totalorder %s16, 4
      // Predicated region
      $region17: #{tpu_custom_call.1} parent=5 // pred_check
        %p163 = pneg %p162
      $region18: #{tpu_custom_call.1} parent=5 // pred_check_branch
        %165 = sbr.rel (%p163) target = $region20
      $region19: #{tpu_custom_call.1} parent=5 // pred_region
        // Predicated region
        $region21: #{tpu_custom_call.1} parent=19 // pred_check
          %p166 = pneg %p57
        $region22: #{tpu_custom_call.1} parent=19 // pred_check_branch
          %168 = sbr.rel (%p166) target = $region24
        $region23: #{tpu_custom_call.1} parent=19 // pred_region
          %s169 = sand.u32 %s47, 1
          %s170 = scalar_lea.sflag [#allocation6], %s169
          %s171 = sand.u32 %s47, 1
          %s172 = scalar_lea.vmem [#allocation5], %s171
          %s174 = ssub.s32 16, 16
          %175 = vsyncadd %s170, %s174
          %s176 = smul.addr %s23, 2
          %s177 = sadd.s32 %s25, %s176
          %s178 = smul.addr %s177, 16
          %s179 = scalar_lea.hbm %s0, %s178
          %s181 = sshll.u32 %s172, 4
          %s182 = int_to_ptr.vmem [resolvable:$true] %s181
          %184 = dma.hbm_to_vmem [thread:$0]  %s179, 16, %s182, %s170
        $region24: #{tpu_custom_call.1} parent=19 // pred_fallthru
          _
        // Predicated region
        $region25: #{tpu_custom_call.1} parent=19 // pred_check
          %p185 = pneg %p83
        $region26: #{tpu_custom_call.1} parent=19 // pred_check_branch
          %187 = sbr.rel (%p185) target = $region28
        $region27: #{tpu_custom_call.1} parent=19 // pred_region
          %s188 = sand.u32 %s16, 1
          %s189 = scalar_lea.sflag [#allocation9], %s188
          %s190 = sand.u32 %s73, 1
          %s191 = smul.addr %s190, 8
          %s192 = scalar_lea.vmem [#allocation8], %s191
          %s194 = ssub.s32 128, 128
          %195 = vsyncadd %s189, %s194
          %s196 = smul.addr %s25, 128
          %s197 = scalar_lea.hbm %s1, %s196
          %s199 = sshll.u32 %s192, 4
          %s200 = int_to_ptr.vmem [resolvable:$true] %s199
          %202 = dma.hbm_to_vmem [thread:$0]  %s197, 128, %s200, %s189
        $region28: #{tpu_custom_call.1} parent=19 // pred_fallthru
          _
      $region20: #{tpu_custom_call.1} parent=5 // pred_fallthru
        _
      %p203 = scmp.le.s32.totalorder 1, %s16
      %p204 = scmp.lt.s32.totalorder %s16, 5
      %p205 = pnand %p203, %p204
      %p206 = pneg %p205
      // Predicated region
      $region29: #{tpu_custom_call.1} parent=5 // pred_check
        _
      $region30: #{tpu_custom_call.1} parent=5 // pred_check_branch
        %208 = sbr.rel (%p205) target = $region32
      $region31: #{tpu_custom_call.1} parent=5 // pred_region
        %s209 = ssub.s32 %s16, 1
        %s210 = sand.u32 %s50, 1
        %s211 = scalar_lea.sflag [#allocation6], %s210
        %s212 = sand.u32 %s50, 1
        %s213 = scalar_lea.vmem [#allocation5], %s212
        // Predicated region
        $region33: #{tpu_custom_call.1} parent=31 // pred_check
          %p214 = pneg %p63
        $region34: #{tpu_custom_call.1} parent=31 // pred_check_branch
          %216 = sbr.rel (%p214) target = $region36
        $region35: #{tpu_custom_call.1} parent=31 // pred_region
          %217 = dma.done %s211, 16
        $region36: #{tpu_custom_call.1} parent=31 // pred_fallthru
          _
        %s218 = sand.u32 %s21, 1
        %s219 = scalar_lea.sflag [#allocation9], %s218
        %s220 = sand.u32 %s76, 1
        %s221 = smul.addr %s220, 8
        %s222 = scalar_lea.vmem [#allocation8], %s221
        // Predicated region
        $region37: #{tpu_custom_call.1} parent=31 // pred_check
          %p223 = pneg %p89
        $region38: #{tpu_custom_call.1} parent=31 // pred_check_branch
          %225 = sbr.rel (%p223) target = $region40
        $region39: #{tpu_custom_call.1} parent=31 // pred_region
          %226 = dma.done %s219, 128
        $region40: #{tpu_custom_call.1} parent=31 // pred_fallthru
          _
        // Predicated region
        $region41: #{tpu_custom_call.1} parent=31 // pred_check
          %p227 = pneg %p110
        $region42: #{tpu_custom_call.1} parent=31 // pred_check_branch
          %229 = sbr.rel (%p227) target = $region44
        $region43: #{tpu_custom_call.1} parent=31 // pred_region
          %230 = dma.done [#allocation9], 128
        $region44: #{tpu_custom_call.1} parent=31 // pred_fallthru
          _
        %s231 = sand.u32 %s50, 1
        %s232 = scalar_lea.sflag [#allocation6], %s231
        %s233 = sand.u32 %s50, 1
        %s234 = scalar_lea.vmem [#allocation5], %s233
        %p235 = pneg %p63
        %p236 = pneg %p60
        %s237 = sand.u32 %s21, 1
        %s238 = scalar_lea.sflag [#allocation9], %s237
        %s239 = sand.u32 %s76, 1
        %s240 = smul.addr %s239, 8
        %s241 = scalar_lea.vmem [#allocation8], %s240
        %p242 = pneg %p89
        %p243 = pneg %p86
        %p244 = pneg %p110
        %p245 = pneg %p107
        %p246 = pneg %p136
        %p247 = pneg %p133
        %v248 = vld [vmem:[%s222] sm:$0xff]
        %v249 = vmul.f32 %v248, %v248
        %v250 = vrot.slane %v249, 4
        %v251 = vadd.f32 %v249, %v250
        %v252 = vrot.slane %v251, 2
        %v253 = vadd.f32 %v251, %v252
        %v254 = vrot.slane %v253, 1
        %v255 = vadd.f32 %v253, %v254
        %v256 = vrsqrt.pop %v255
        %v257 = vmul.f32 %v255, %v256
        %vm258 = vcmp.eq.f32.partialorder %v255, inf
        %v259 = vsel %vm258, %v255, %v257
        %vm260 = vcmp.eq.f32.partialorder %v255, 0.0
        %v261 = vand.u32 %v255, 2147483648
        %v262 = vsel %vm260, %v261, %v259
        %v263 = vadd.f32 %v262, 1e-08
        %v264 = vrcp.pop %v263
        %v265 = vmul.f32 %v248, %v264
        %v266 = vld [vmem:[%s213] sm:$0x1]
        %v267 = vlaneseq
        %v268 = vshrl.u32 %v267, 7
        %v269 = vlaneseq
        %v270 = vshrl.u32 %v269, 7
        %v271 = vsub.s32 0, %v270
        %v272 = vrot.slane %v266, %v271
        %vm273 = vcmp.eq.s32.totalorder %v268, %v272
        %v274 = vsel %vm273, 1.0, 0.0
        %p275 = scmp.eq.s32.totalorder %s27, 0
        %p276 = scmp.eq.s32.totalorder %s28, 0
        %p277 = pnand %p275, %p276
        %p278 = pneg %p277
        // Predicated region
        $region45: #{tpu_custom_call.1} parent=31 // pred_check
          _
        $region46: #{tpu_custom_call.1} parent=31 // pred_check_branch
          %280 = sbr.rel (%p277) target = $region48
        $region47: #{tpu_custom_call.1} parent=31 // pred_region
          %vm281 = vcmask 64512
          %282 = vst.msk [vmem:[#allocation2] sm:$0xff] %vm281, 0.0
          %vm283 = vcmask 57344
          %284 = vst.msk [vmem:[#allocation2 + $0x8] sm:$0x1] %vm283, 0.0
          %285 = vst [vmem:[#allocation4] sm:$0x1] 0.0
        $region48: #{tpu_custom_call.1} parent=31 // pred_fallthru
          _
        // Predicated region
        $region49: #{tpu_custom_call.1} parent=31 // pred_check
          %p286 = pneg %p275
        $region50: #{tpu_custom_call.1} parent=31 // pred_check_branch
          %288 = sbr.rel (%p286) target = $region52
        $region51: #{tpu_custom_call.1} parent=31 // pred_region
          %v289 = vld [vmem:[#allocation2] sm:$0xff]
          %v290 = vld [vmem:[#allocation2 + $0x8] sm:$0x1]
          %291 = vmatprep.subr.mxu0 0.0
          %292 = vmatpush1.xpose.msra.mxu0 %v274
          %293 = vmatprep.subr.mxu0 0.0
          %294 = vmatpush1.xpose.msra.mxu0 0.0
          %295 = vmatprep.subr.mxu0 0.0
          %296 = vmatpush1.xpose.msra.mxu0 0.0
          %297 = vmatprep.subr.mxu0 0.0
          %298 = vmatpush1.xpose.msra.mxu0 0.0
          %299 = vmatprep.subr.mxu0 0.0
          %300 = vmatpush1.xpose.msra.mxu0 0.0
          %301 = vmatprep.subr.mxu0 0.0
          %302 = vmatpush1.xpose.msra.mxu0 0.0
          %303 = vmatprep.subr.mxu0 0.0
          %304 = vmatpush1.xpose.msra.mxu0 0.0
          %305 = vmatprep.subr.mxu0 0.0
          %306 = vmatpush1.xpose.msra.mxu0 0.0
          %307 = vmatprep.subr.mxu0 0.0
          %308 = vmatpush1.xpose.msra.mxu0 0.0
          %309 = vmatprep.subr.mxu0 0.0
          %310 = vmatpush1.xpose.msra.mxu0 0.0
          %311 = vmatprep.subr.mxu0 0.0
          %312 = vmatpush1.xpose.msra.mxu0 0.0
          %313 = vmatprep.subr.mxu0 0.0
          %314 = vmatpush1.xpose.msra.mxu0 0.0
          %315 = vmatprep.subr.mxu0 0.0
          %316 = vmatpush1.xpose.msra.mxu0 0.0
          %317 = vmatprep.subr.mxu0 0.0
          %318 = vmatpush1.xpose.msra.mxu0 0.0
          %319 = vmatprep.subr.mxu0 0.0
          %320 = vmatpush1.xpose.msra.mxu0 0.0
          %321 = vmatprep.subr.mxu0 0.0
          %322 = vmatpush1.xpose.msra.mxu0 0.0
          %323 = vmatprep.subr.mxu0 0.0
          %324 = vmatpush1.xpose.msra.mxu0 0.0
          %325 = vmatprep.subr.mxu0 0.0
          %326 = vmatpush1.xpose.msra.mxu0 0.0
          %327 = vmatprep.subr.mxu0 0.0
          %328 = vmatpush1.xpose.msra.mxu0 0.0
          %329 = vmatprep.subr.mxu0 0.0
          %330 = vmatpush1.xpose.msra.mxu0 0.0
          %331 = vmatprep.subr.mxu0 0.0
          %332 = vmatpush1.xpose.msra.mxu0 0.0
          %333 = vmatprep.subr.mxu0 0.0
          %334 = vmatpush1.xpose.msra.mxu0 0.0
          %335 = vmatprep.subr.mxu0 0.0
          %336 = vmatpush1.xpose.msra.mxu0 0.0
          %337 = vmatprep.subr.mxu0 0.0
          %338 = vmatpush1.xpose.msra.mxu0 0.0
          %339 = vmatprep.subr.mxu0 0.0
          %340 = vmatpush1.xpose.msra.mxu0 0.0
          %341 = vmatprep.subr.mxu0 0.0
          %342 = vmatpush1.xpose.msra.mxu0 0.0
          %343 = vmatprep.subr.mxu0 0.0
          %344 = vmatpush1.xpose.msra.mxu0 0.0
          %345 = vmatprep.subr.mxu0 0.0
          %346 = vmatpush1.xpose.msra.mxu0 0.0
          %347 = vmatprep.subr.mxu0 0.0
          %348 = vmatpush1.xpose.msra.mxu0 0.0
          %349 = vmatprep.subr.mxu0 0.0
          %350 = vmatpush1.xpose.msra.mxu0 0.0
          %351 = vmatprep.subr.mxu0 0.0
          %352 = vmatpush1.xpose.msra.mxu0 0.0
          %353 = vmatprep.subr.mxu0 0.0
          %354 = vmatpush1.xpose.msra.mxu0 0.0
          %355 = vmatprep.mubr.f32.mxu0 0.0
          %356 = vmatmul.mubr.f32.gmra.mrb[0].mxu0 %v265
          %v357 = vpop.f32.mrb[0].mxu0
          %v358 = vadd.f32 0.0, %v357
          %v359 = vpop.f32.mrb[0].mxu0
          %360 = vmatprep.mubr.f32.mxu0 0.0
          %361 = vmatmul.mubr.f32.gmra.mrb[0].mxu0 1.0
          %v362 = vpop.f32.mrb[0].mxu0
          %v363 = vadd.f32 0.0, %v362
          %v364 = vpop.f32.mrb[0].mxu0
          %365 = vdwg.mxu0
          %v366 = vadd.f32 %v289, %v358
          %v367 = vadd.f32 %v290, %v363
          %vm368 = vcmask 64512
          %369 = vst.msk [vmem:[#allocation2] sm:$0xff] %vm368, %v366
          %vm370 = vcmask 57344
          %371 = vst.msk [vmem:[#allocation2 + $0x8] sm:$0x1] %vm370, %v367
        $region52: #{tpu_custom_call.1} parent=31 // pred_fallthru
          _
        %p372 = scmp.eq.s32.totalorder %s27, 1
        // Predicated region
        $region53: #{tpu_custom_call.1} parent=31 // pred_check
          %p373 = pneg %p372
        $region54: #{tpu_custom_call.1} parent=31 // pred_check_branch
          %375 = sbr.rel (%p373) target = $region56
        $region55: #{tpu_custom_call.1} parent=31 // pred_region
          // Predicated region
          $region57: #{tpu_custom_call.1} parent=55 // pred_check
            %p376 = pneg %p276
          $region58: #{tpu_custom_call.1} parent=55 // pred_check_branch
            %378 = sbr.rel (%p376) target = $region60
          $region59: #{tpu_custom_call.1} parent=55 // pred_region
            %v379 = vld [vmem:[#allocation2 + $0x8] sm:$0x1]
            %v380 = vld [vmem:[#allocation2] sm:$0xff]
            %v381 = vmax.f32 %v379, 1.0
            %v382 = vlaneseq
            %v383 = vshrl.u32 %v382, 7
            %v384 = vsub.s32 0, %v383
            %v385 = vrot.slane %v381, %v384
            %v386 = vrcp.pop %v385
            %v387 = vmul.f32 %v380, %v386
            %vm388 = vcmp.gt.f32.partialorder %v379, 0.5
            %v389 = vsel %vm388, 1.0, 0.0
            %390 = vxpose.xlu0.b32.start [1/16] %v380, 128
            %391 = vxpose.xlu0.b32.cont [2/16] %v379, 128
            %392 = vxpose.xlu0.b32.cont [3/16] 0.0, 128
            %393 = vxpose.xlu0.b32.cont [4/16] 0.0, 128
            %394 = vxpose.xlu0.b32.cont [5/16] 0.0, 128
            %395 = vxpose.xlu0.b32.cont [6/16] 0.0, 128
            %396 = vxpose.xlu0.b32.cont [7/16] 0.0, 128
            %397 = vxpose.xlu0.b32.cont [8/16] 0.0, 128
            %398 = vxpose.xlu0.b32.cont [9/16] 0.0, 128
            %399 = vxpose.xlu0.b32.cont [10/16] 0.0, 128
            %400 = vxpose.xlu0.b32.cont [11/16] 0.0, 128
            %401 = vxpose.xlu0.b32.cont [12/16] 0.0, 128
            %402 = vxpose.xlu0.b32.cont [13/16] 0.0, 128
            %403 = vxpose.xlu0.b32.cont [14/16] 0.0, 128
            %404 = vxpose.xlu0.b32.cont [15/16] 0.0, 128
            %405 = vxpose.xlu0.b32.end [16/16] 0.0, 128
            %v406 = vpop.trf.xlu0
            %v407 = vpop.trf.xlu0
            %v408 = vpop.trf.xlu0
            %v409 = vpop.trf.xlu0
            %v410 = vpop.trf.xlu0
            %v411 = vpop.trf.xlu0
            %v412 = vpop.trf.xlu0
            %v413 = vpop.trf.xlu0
            %v414 = vpop.trf.xlu0
            %v415 = vpop.trf.xlu0
            %v416 = vpop.trf.xlu0
            %v417 = vpop.trf.xlu0
            %v418 = vpop.trf.xlu0
            %v419 = vpop.trf.xlu0
            %v420 = vpop.trf.xlu0
            %v421 = vpop.trf.xlu0
            %vm422 = vcmp.gt.f32.partialorder %v406, 0.5
            %v423 = vsel %vm422, 1.0, 0.0
            %v424 = vld [vmem:[#allocation10] sm:$0xff]
            %426 = vset.pattern.permute.xlu0 8
            %427 = vperm.xlu0 %426, %v423
            %v428 = vpop.permute.xlu0 %427
            %v430 = vmul.f32 %v424, %v428
            %vm431 = vcmask 64512
            %v432 = vsel %vm431, %v430, 0.0
            %v433 = vrot.slane %v432, 4
            %v434 = vadd.f32 %v432, %v433
            %v435 = vrot.slane %v434, 2
            %v436 = vadd.f32 %v434, %v435
            %v437 = vrot.slane %v436, 1
            %v438 = vadd.f32 %v436, %v437
            %v439 = vmax.f32 %v438, 1.0
            %v440 = vmul.f32 %v439, %v381
            %v441 = vrcp.pop %v440
            %v442 = vmul.f32 %v389, %v441
            %443 = vst.msk [vmem:[#allocation3] sm:$0xff] %vm431, %v387
            %vm444 = vcmask 57344
            %445 = vst.msk [vmem:[#allocation3 + $0x8] sm:$0x1] %vm444, %v442
          $region60: #{tpu_custom_call.1} parent=55 // pred_fallthru
            _
          %v446 = vld [vmem:[#allocation3] sm:$0xff]
          %v447 = vld [vmem:[#allocation3 + $0x8] sm:$0x1]
          %vm448 = vcmask 64512
          %v450 = vsel %vm448, %v446, 0
          %v453 = vsel %vm448, %v447, 0
          %455 = vmatprep.subr.mxu0 0.0
          %456 = vmatpush1.msra.mxu0 %v274
          %457 = vmatprep.subr.mxu0 0.0
          %458 = vmatpush1.msra.mxu0 0.0
          %459 = vmatprep.subr.mxu0 0.0
          %460 = vmatpush1.msra.mxu0 0.0
          %461 = vmatprep.subr.mxu0 0.0
          %462 = vmatpush1.msra.mxu0 0.0
          %463 = vmatprep.subr.mxu0 0.0
          %464 = vmatpush1.msra.mxu0 0.0
          %465 = vmatprep.subr.mxu0 0.0
          %466 = vmatpush1.msra.mxu0 0.0
          %467 = vmatprep.subr.mxu0 0.0
          %468 = vmatpush1.msra.mxu0 0.0
          %469 = vmatprep.subr.mxu0 0.0
          %470 = vmatpush1.msra.mxu0 0.0
          %471 = vmatprep.subr.mxu0 0.0
          %472 = vmatpush1.msra.mxu0 0.0
          %473 = vmatprep.subr.mxu0 0.0
          %474 = vmatpush1.msra.mxu0 0.0
          %475 = vmatprep.subr.mxu0 0.0
          %476 = vmatpush1.msra.mxu0 0.0
          %477 = vmatprep.subr.mxu0 0.0
          %478 = vmatpush1.msra.mxu0 0.0
          %479 = vmatprep.subr.mxu0 0.0
          %480 = vmatpush1.msra.mxu0 0.0
          %481 = vmatprep.subr.mxu0 0.0
          %482 = vmatpush1.msra.mxu0 0.0
          %483 = vmatprep.subr.mxu0 0.0
          %484 = vmatpush1.msra.mxu0 0.0
          %485 = vmatprep.subr.mxu0 0.0
          %486 = vmatpush1.msra.mxu0 0.0
          %487 = vmatprep.subr.mxu0 0.0
          %488 = vmatpush1.msra.mxu0 0.0
          %489 = vmatprep.subr.mxu0 0.0
          %490 = vmatpush1.msra.mxu0 0.0
          %491 = vmatprep.subr.mxu0 0.0
          %492 = vmatpush1.msra.mxu0 0.0
          %493 = vmatprep.subr.mxu0 0.0
          %494 = vmatpush1.msra.mxu0 0.0
          %495 = vmatprep.subr.mxu0 0.0
          %496 = vmatpush1.msra.mxu0 0.0
          %497 = vmatprep.subr.mxu0 0.0
          %498 = vmatpush1.msra.mxu0 0.0
          %499 = vmatprep.subr.mxu0 0.0
          %500 = vmatpush1.msra.mxu0 0.0
          %501 = vmatprep.subr.mxu0 0.0
          %502 = vmatpush1.msra.mxu0 0.0
          %503 = vmatprep.subr.mxu0 0.0
          %504 = vmatpush1.msra.mxu0 0.0
          %505 = vmatprep.subr.mxu0 0.0
          %506 = vmatpush1.msra.mxu0 0.0
          %507 = vmatprep.subr.mxu0 0.0
          %508 = vmatpush1.msra.mxu0 0.0
          %509 = vmatprep.subr.mxu0 0.0
          %510 = vmatpush1.msra.mxu0 0.0
          %511 = vmatprep.subr.mxu0 0.0
          %512 = vmatpush1.msra.mxu0 0.0
          %513 = vmatprep.subr.mxu0 0.0
          %514 = vmatpush1.msra.mxu0 0.0
          %515 = vmatprep.subr.mxu0 0.0
          %516 = vmatpush1.msra.mxu0 0.0
          %517 = vmatprep.subr.mxu0 0.0
          %518 = vmatpush1.msra.mxu0 0.0
          %519 = vmatprep.mubr.f32.mxu0 0.0
          %520 = vmatmul.mubr.f32.gmra.mrb[0].mxu0 %v450
          %v521 = vpop.f32.mrb[0].mxu0
          %v522 = vadd.f32 0.0, %v521
          %v523 = vpop.f32.mrb[0].mxu0
          %524 = vmatprep.mubr.f32.mxu0 0.0
          %525 = vmatmul.mubr.f32.gmra.mrb[0].mxu0 %v453
          %v526 = vpop.f32.mrb[0].mxu0
          %v527 = vadd.f32 0.0, %v526
          %v528 = vpop.f32.mrb[0].mxu0
          %529 = vdwg.mxu0
          %v530 = vsub.f32 %v522, %v265
          %v531 = vand.u32 2147483647, %v530
          %v532 = vrot.slane %v531, 4
          %v533 = vadd.f32 %v531, %v532
          %v534 = vrot.slane %v533, 2
          %v535 = vadd.f32 %v533, %v534
          %v536 = vrot.slane %v535, 1
          %v537 = vadd.f32 %v535, %v536
          %v538 = vld [vmem:[#allocation4] sm:$0x1]
          %v539 = vsub.f32 %v537, 0.5
          %v540 = vmax.f32 %v539, 0.0
          %v541 = vmul.f32 %v540, %v540
          %v542 = vmul.f32 %v541, %v527
          %v543 = vadd.f32 %v538, %v542
          %544 = vst [vmem:[#allocation4] sm:$0x1] %v543
          %p545 = scmp.eq.s32.totalorder %s28, 1
          // Predicated region
          $region61: #{tpu_custom_call.1} parent=55 // pred_check
            %p546 = pneg %p545
          $region62: #{tpu_custom_call.1} parent=55 // pred_check_branch
            %548 = sbr.rel (%p546) target = $region64
          $region63: #{tpu_custom_call.1} parent=55 // pred_region
            %v549 = vld [vmem:[#allocation10] sm:$0xff]
            %v550 = vld [vmem:[#allocation2 + $0x8] sm:$0x1]
            %vm551 = vcmp.gt.f32.partialorder %v550, 0.5
            %v552 = vsel %vm551, 1.0, 0.0
            %v553 = vlaneseq
            %v554 = vshrl.u32 %v553, 7
            %v555 = vsub.s32 0, %v554
            %v556 = vrot.slane %v552, %v555
            %v557 = vmul.f32 %v549, %v556
            %v558 = vsel %vm448, %v557, 0.0
            %559 = vadd.xlane.f32.xlu0 %v558
            %v560 = vpop.xlane.xlu0 %559
            %v561 = vld [vmem:[#allocation3] sm:$0xff]
            %v562 = vld [vmem:[#allocation3 + $0x8] sm:$0x1]
            %563 = vxpose.xlu0.b32.start [1/16] %v561, 128
            %564 = vxpose.xlu0.b32.cont [2/16] %v562, 128
            %565 = vxpose.xlu0.b32.cont [3/16] 0.0, 128
            %566 = vxpose.xlu0.b32.cont [4/16] 0.0, 128
            %567 = vxpose.xlu0.b32.cont [5/16] 0.0, 128
            %568 = vxpose.xlu0.b32.cont [6/16] 0.0, 128
            %569 = vxpose.xlu0.b32.cont [7/16] 0.0, 128
            %570 = vxpose.xlu0.b32.cont [8/16] 0.0, 128
            %571 = vxpose.xlu0.b32.cont [9/16] 0.0, 128
            %572 = vxpose.xlu0.b32.cont [10/16] 0.0, 128
            %573 = vxpose.xlu0.b32.cont [11/16] 0.0, 128
            %574 = vxpose.xlu0.b32.cont [12/16] 0.0, 128
            %575 = vxpose.xlu0.b32.cont [13/16] 0.0, 128
            %576 = vxpose.xlu0.b32.cont [14/16] 0.0, 128
            %577 = vxpose.xlu0.b32.cont [15/16] 0.0, 128
            %578 = vxpose.xlu0.b32.end [16/16] 0.0, 128
            %v579 = vpop.trf.xlu0
            %v580 = vpop.trf.xlu0
            %v581 = vpop.trf.xlu0
            %v582 = vpop.trf.xlu0
            %v583 = vpop.trf.xlu0
            %v584 = vpop.trf.xlu0
            %v585 = vpop.trf.xlu0
            %v586 = vpop.trf.xlu0
            %v587 = vpop.trf.xlu0
            %v588 = vpop.trf.xlu0
            %v589 = vpop.trf.xlu0
            %v590 = vpop.trf.xlu0
            %v591 = vpop.trf.xlu0
            %v592 = vpop.trf.xlu0
            %v593 = vpop.trf.xlu0
            %v594 = vpop.trf.xlu0
            %v595 = vld [vmem:[#allocation3] sm:$0xff]
            %vm596 = vcmp.gt.f32.partialorder %v579, 0.0
            %v597 = vsel %vm596, 1.0, 0.0
            %599 = vset.pattern.permute.xlu0 0
            %600 = vperm.xlu0 %599, %v579
            %v601 = vpop.permute.xlu0 %600
            %v603 = vlaneseq
            %v604 = vshrl.u32 %v603, 7
            %v605 = vsub.s32 0, %v604
            %v606 = vrot.slane %v595, %v605
            %v607 = vsub.f32 %v601, %v606
            %v608 = vand.u32 2147483647, %v607
            %v609 = vadd.f32 %v608, 0.0
            %610 = vset.pattern.permute.xlu0 1
            %611 = vperm.xlu0 %610, %v579
            %v612 = vpop.permute.xlu0 %611
            %v614 = vlaneseq
            %v615 = vshrl.u32 %v614, 7
            %v616 = vsub.s32 1, %v615
            %v617 = vrot.slane %v595, %v616
            %v618 = vsub.f32 %v612, %v617
            %v619 = vand.u32 2147483647, %v618
            %v620 = vadd.f32 %v619, 0.0
            %621 = vset.pattern.permute.xlu0 2
            %622 = vperm.xlu0 %621, %v579
            %v623 = vpop.permute.xlu0 %622
            %v625 = vlaneseq
            %v626 = vshrl.u32 %v625, 7
            %v627 = vsub.s32 2, %v626
            %v628 = vrot.slane %v595, %v627
            %v629 = vsub.f32 %v623, %v628
            %v630 = vand.u32 2147483647, %v629
            %v631 = vadd.f32 %v630, 0.0
            %632 = vset.pattern.permute.xlu0 3
            %633 = vperm.xlu0 %632, %v579
            %v634 = vpop.permute.xlu0 %633
            %v636 = vlaneseq
            %v637 = vshrl.u32 %v636, 7
            %v638 = vsub.s32 3, %v637
            %v639 = vrot.slane %v595, %v638
            %v640 = vsub.f32 %v634, %v639
            %v641 = vand.u32 2147483647, %v640
            %v642 = vadd.f32 %v641, 0.0
            %643 = vset.pattern.permute.xlu0 4
            %644 = vperm.xlu0 %643, %v579
            %v645 = vpop.permute.xlu0 %644
            %v647 = vlaneseq
            %v648 = vshrl.u32 %v647, 7
            %v649 = vsub.s32 4, %v648
            %v650 = vrot.slane %v595, %v649
            %v651 = vsub.f32 %v645, %v650
            %v652 = vand.u32 2147483647, %v651
            %v653 = vadd.f32 %v609, %v652
            %654 = vset.pattern.permute.xlu0 5
            %655 = vperm.xlu0 %654, %v579
            %v656 = vpop.permute.xlu0 %655
            %v658 = vlaneseq
            %v659 = vshrl.u32 %v658, 7
            %v660 = vsub.s32 5, %v659
            %v661 = vrot.slane %v595, %v660
            %v662 = vsub.f32 %v656, %v661
            %v663 = vand.u32 2147483647, %v662
            %v664 = vadd.f32 %v620, %v663
            %665 = vset.pattern.permute.xlu0 6
            %666 = vperm.xlu0 %665, %v579
            %v667 = vpop.permute.xlu0 %666
            %v669 = vlaneseq
            %v670 = vshrl.u32 %v669, 7
            %v671 = vsub.s32 6, %v670
            %v672 = vrot.slane %v595, %v671
            %v673 = vsub.f32 %v667, %v672
            %v674 = vand.u32 2147483647, %v673
            %v675 = vadd.f32 %v631, %v674
            %676 = vset.pattern.permute.xlu0 7
            %677 = vperm.xlu0 %676, %v579
            %v678 = vpop.permute.xlu0 %677
            %v680 = vlaneseq
            %v681 = vshrl.u32 %v680, 7
            %v682 = vsub.s32 7, %v681
            %v683 = vrot.slane %v595, %v682
            %v684 = vsub.f32 %v678, %v683
            %v685 = vand.u32 2147483647, %v684
            %v686 = vadd.f32 %v642, %v685
            %v687 = vadd.f32 %v653, %v664
            %v688 = vadd.f32 %v687, %v675
            %v689 = vadd.f32 %v688, %v686
            %v690 = vlaneseq
            %v691 = vand.u32 %v690, 127
            %vm692 = vcmp.eq.s32.totalorder %v268, %v691
            %v693 = vsel %vm692, 0.0, 1.0
            %vm694 = vcmp.gt.f32.partialorder %v560, 1.5
            %v695 = vsel %vm694, 1.0, 0.0
            %v696 = vsub.f32 %v560, 1.0
            %v697 = vmul.f32 %v560, %v696
            %v698 = vmax.f32 %v697, 1.0
            %v699 = vmul.f32 %v549, %v693
            %701 = vset.pattern.permute.xlu0 8
            %702 = vperm.xlu0 %701, %v597
            %v703 = vpop.permute.xlu0 %702
            %v705 = vmul.f32 %v703, %v556
            %v706 = vmul.f32 %v699, %v705
            %v707 = vmul.f32 %v706, %v695
            %v708 = vrcp.pop %v698
            %v709 = vmul.f32 %v707, %v708
            %v710 = vsub.f32 3.0, %v689
            %v711 = vmax.f32 %v710, 0.0
            %v712 = vmul.f32 %v711, %v711
            %v713 = vmul.f32 %v712, %v709
            %v714 = vsel %vm448, %v713, 0.0
            %715 = vadd.xlane.f32.xlu0 %v714
            %v716 = vpop.xlane.xlu0 %715
            %v717 = vrot.slane %v716, 4
            %v718 = vadd.f32 %v716, %v717
            %v719 = vrot.slane %v718, 2
            %v720 = vadd.f32 %v718, %v719
            %v721 = vrot.slane %v720, 1
            %v722 = vadd.f32 %v720, %v721
            %s723 = vtos %v722
            %v724 = vstv %s723
            %v725 = vld [vmem:[#allocation4] sm:$0x1]
            %vm726 = vcmask 1040384
            %v727 = vsel %vm726, %v725, 0.0
            %728 = vadd.xlane.f32.xlu0 %v727
            %v729 = vpop.xlane.xlu0 %728
            %v730 = vrot.slane %v729, 4
            %v731 = vadd.f32 %v729, %v730
            %v732 = vrot.slane %v731, 2
            %v733 = vadd.f32 %v731, %v732
            %v734 = vrot.slane %v733, 1
            %v735 = vadd.f32 %v733, %v734
            %s736 = vtos %v735
            %v737 = vstv %s736
            %vm738 = vcmp.gt.f32.partialorder %v560, 0.5
            %v739 = vsel %vm738, 1.0, 0.0
            %vm740 = vcmask 7168
            %v741 = vsel %vm740, %v739, 0.0
            %742 = vadd.xlane.f32.xlu0 %v741
            %v743 = vpop.xlane.xlu0 %742
            %v744 = vrot.slane %v743, 4
            %v745 = vadd.f32 %v743, %v744
            %v746 = vrot.slane %v745, 2
            %v747 = vadd.f32 %v745, %v746
            %v748 = vrot.slane %v747, 1
            %v749 = vadd.f32 %v747, %v748
            %s750 = vtos %v749
            %v751 = vstv %s750
            %v752 = vrcp.pop 4.0
            %v753 = vmul.f32 %v751, %v752
            %v754 = vadd.f32 %v737, %v724
            %v755 = vmax.f32 %v753, 1.0
            %v756 = vrcp.pop %v755
            %v757 = vmul.f32 %v754, %v756
            %vm758 = vcmask 0
            %759 = vst.msk [vmem:[#allocation11] sm:$0x1] %vm758, %v757
          $region64: #{tpu_custom_call.1} parent=55 // pred_fallthru
            _
        $region56: #{tpu_custom_call.1} parent=31 // pred_fallthru
          _
        // Predicated region
        $region65: #{tpu_custom_call.1} parent=31 // pred_check
          %p760 = pneg %p133
        $region66: #{tpu_custom_call.1} parent=31 // pred_check_branch
          %762 = sbr.rel (%p760) target = $region68
        $region67: #{tpu_custom_call.1} parent=31 // pred_region
          %s764 = ssub.s32 16, 16
          %765 = vsyncadd [#allocation7], %s764
          %s766 = smul.addr %s26, 16
          %s767 = scalar_lea.hbm %s3, %s766
          %s769 = sshll.u32 [#allocation11], 4
          %s770 = int_to_ptr.vmem [resolvable:$true] %s769
          %772 = dma.vmem_to_hbm [thread:$0]  %s770, 16, %s767, [#allocation7]
        $region68: #{tpu_custom_call.1} parent=31 // pred_fallthru
          _
        // Predicated region
        $region69: #{tpu_custom_call.1} parent=31 // pred_check
          %p773 = pneg %p133
        $region70: #{tpu_custom_call.1} parent=31 // pred_check_branch
          %775 = sbr.rel (%p773) target = $region72
        $region71: #{tpu_custom_call.1} parent=31 // pred_region
          %776 = dma.done [#allocation7], 16
        $region72: #{tpu_custom_call.1} parent=31 // pred_fallthru
          _
      $region32: #{tpu_custom_call.1} parent=5 // pred_fallthru
        _
      %p777 = scmp.le.s32.totalorder 2, %s16
      // Predicated region
      $region73: #{tpu_custom_call.1} parent=5 // pred_check
        %p778 = pneg %p777
      $region74: #{tpu_custom_call.1} parent=5 // pred_check_branch
        %780 = sbr.rel (%p778) target = $region76
      $region75: #{tpu_custom_call.1} parent=5 // pred_region
        %s781 = ssub.s32 %s16, 2
      $region76: #{tpu_custom_call.1} parent=5 // pred_fallthru
        _
    $region6: #{tpu_custom_call.1} parent=1 // loop_footer
      %s20 = sadd.s32 1, %s16
    $region7: #{tpu_custom_call.1} parent=1 // loop_footer_branch
      %15 = sbr.rel target = $region3
    $region8: #{tpu_custom_call.1} parent=1 // loop_exit
      _
    %782 = vsyncpa [#allocation6], 1
    %s783 = scalar_lea.sflag [#allocation6], 1
    %784 = vsyncpa %s783, 1
    %785 = vsyncpa [#allocation9], 1
    %s786 = scalar_lea.sflag [#allocation9], 1
    %787 = vsyncpa %s786, 1
    %788 = vsyncpa [#allocation7], 1
    %s789 = scalar_lea.sflag [#allocation7], 1
    %790 = vsyncpa %s789, 1

</llo_original>
